<compile_context>
chip_gen: v6e
topology: v6e:2x2x1
jax: 0.10.0
libtpu: 0.0.40
codegen_flags: <defaults>
</compile_context>

<pallas_src>
import functools

import jax
import jax.numpy as jnp
from jax.experimental import pallas as pl
from jax.experimental.pallas import tpu as pltpu

TEST_MODEL_CONFIG = {
    "emb_out_dim": 16,
    "num_classes": 4,
    "tensor_dim": 2,
}

_HID = TEST_MODEL_CONFIG["emb_out_dim"]
_NCLS = TEST_MODEL_CONFIG["num_classes"]
_DIN = TEST_MODEL_CONFIG["tensor_dim"]


def _mlp_kernel(xt_ref, w1_ref, w2_ref, w3_ref, w4_ref, b_ref, o_ref):
    """One batch tile. xt_ref: (d_in, TB); o_ref: (num_classes, TB)."""
    d_in = xt_ref.shape[0]

    # Packed biases: [b1(16) | b2(16) | b3(16) | b4(4)] as (52, 1) column vectors.
    b1 = b_ref[0:_HID, :]
    b2 = b_ref[_HID:2 * _HID, :]
    b3 = b_ref[2 * _HID:3 * _HID, :]
    b4 = b_ref[3 * _HID:3 * _HID + _NCLS, :]

    xt = xt_ref[...]                     # (d_in, TB)
    w1 = w1_ref[...]                     # (HID, d_in)  (PyTorch (out, in) layout)

    # Layer 1: K=2 contraction -> broadcasted VPU FMAs (skip the MXU entirely).
    h = b1 + w1[:, 0:1] * xt[0:1, :]
    for i in range(1, d_in):
        h = h + w1[:, i:i + 1] * xt[i:i + 1, :]
    h = jnp.maximum(h, 0.0)              # (HID, TB)

    # Layers 2 & 3: (16,16) @ (16,TB) on the MXU, f32 accumulate.
    h = jnp.dot(w2_ref[...], h, preferred_element_type=jnp.float32) + b2
    h = jnp.maximum(h, 0.0)

    h = jnp.dot(w3_ref[...], h, preferred_element_type=jnp.float32) + b3
    h = jnp.maximum(h, 0.0)

    # Layer 4: (4,16) @ (16,TB); output last dim = TB -> lane-dense stores.
    logits = jnp.dot(w4_ref[...], h, preferred_element_type=jnp.float32) + b4
    o_ref[...] = logits.astype(o_ref.dtype)


@functools.partial(jax.jit, static_argnames=("tile_batch",))
def embedding_model_forward(x, params, *, tile_batch=1024):
    """x: (batch, tensor_dim) f32. params: list of (w, b) in PyTorch layout
    (w: (out, in), b: (out,)). Returns (batch, num_classes) logits."""
    (w1, b1), (w2, b2), (w3, b3), (w4, b4) = params
    batch = x.shape[0]
    d_in = w1.shape[1]
    num_classes = w4.shape[0]

    # Choose a lane-aligned batch tile and pad the batch up to a multiple of it.
    if batch <= tile_batch:
        tb = max(128, pl.cdiv(batch, 128) * 128)
        padded = tb
    else:
        tb = tile_batch
        padded = pl.cdiv(batch, tb) * tb
    grid = (padded // tb,)

    # Feature-major input slab: (d_in, padded_batch). Zero-pad the tail tile.
    xt = jnp.zeros((d_in, padded), jnp.float32).at[:, :batch].set(x.T)

    # Pack the four biases into a single (52, 1) operand.
    b_packed = jnp.concatenate([b1, b2, b3, b4]).reshape(-1, 1).astype(jnp.float32)

    flops = 2 * batch * (d_in * _HID + _HID * _HID + _HID * _HID + _HID * num_classes)
    param_bytes = 4 * sum(int(w.size) + int(b.size) for (w, b) in params)
    bytes_accessed = 4 * (int(x.size) + batch * num_classes) + param_bytes

    out_t = pl.pallas_call(
        _mlp_kernel,
        out_shape=jax.ShapeDtypeStruct((num_classes, padded), jnp.float32),
        grid=grid,
        in_specs=[
            pl.BlockSpec((d_in, tb), lambda i: (0, i)),        # batch-tiled input
            pl.BlockSpec(w1.shape, lambda i: (0, 0)),          # resident weights
            pl.BlockSpec(w2.shape, lambda i: (0, 0)),
            pl.BlockSpec(w3.shape, lambda i: (0, 0)),
            pl.BlockSpec(w4.shape, lambda i: (0, 0)),
            pl.BlockSpec(b_packed.shape, lambda i: (0, 0)),    # packed biases
        ],
        out_specs=pl.BlockSpec((num_classes, tb), lambda i: (0, i)),
        compiler_params=pltpu.CompilerParams(
            dimension_semantics=("parallel",),                 # megacore on v7x
        ),
        cost_estimate=pl.CostEstimate(
            flops=flops, transcendentals=0, bytes_accessed=bytes_accessed),
    )(xt, w1, w2, w3, w4, b_packed)

    # Back to (batch, num_classes); drop batch padding.
    return out_t[:, :batch].T


def init_params(key):
    """PyTorch-layout init: w (out, in), b (out,), U(-1/sqrt(in), 1/sqrt(in))."""
    dims = [(_DIN, _HID), (_HID, _HID), (_HID, _HID), (_HID, _NCLS)]
    params = []
    for fan_in, fan_out in dims:
        key, kw, kb = jax.random.split(key, 3)
        bound = 1.0 / (fan_in ** 0.5)
        w = jax.random.uniform(kw, (fan_out, fan_in), jnp.float32, -bound, bound)
        b = jax.random.uniform(kb, (fan_out,), jnp.float32, -bound, bound)
        params.append((w, b))
    return params


def reference_forward(x, params):
    h = x
    for i, (w, b) in enumerate(params):
        h = h @ w.T + b
        if i < len(params) - 1:
            h = jnp.maximum(h, 0.0)
    return h


if __name__ == "__main__":
    key = jax.random.PRNGKey(0)
    key, kx = jax.random.split(key)

    batch = 8
    x = jax.random.normal(kx, (batch, _DIN), jnp.float32)
    params = init_params(key)

    out = embedding_model_forward(x, params)
    out = jax.block_until_ready(out)

    ref = reference_forward(x, params)
    assert out.shape == (batch, _NCLS)
    assert jnp.allclose(out, ref, atol=1e-5, rtol=1e-5), (
        float(jnp.max(jnp.abs(out - ref))))

    print("KERNEL_OK")
</pallas_src>

<mosaic_0001>
module attributes {stable_mosaic.version = 11 : i64} {
  func.func @_mlp_kernel(%arg0: i32, %arg1: memref<2x128xf32, #tpu.memory_space<vmem>>, %arg2: memref<16x2xf32, #tpu.memory_space<vmem>>, %arg3: memref<16x16xf32, #tpu.memory_space<vmem>>, %arg4: memref<16x16xf32, #tpu.memory_space<vmem>>, %arg5: memref<4x16xf32, #tpu.memory_space<vmem>>, %arg6: memref<52x1xf32, #tpu.memory_space<vmem>>, %arg7: memref<4x128xf32, #tpu.memory_space<vmem>>) attributes {dimension_semantics = [#tpu.dimension_semantics<parallel>], iteration_bounds = array<i64: 1>, scalar_prefetch = 0 : i64, scratch_operands = 0 : i64, tpu.core_type = #tpu.core_type<tc>, window_params = [{transform_indices = @transform_0, window_bounds = array<i64: 2, 128>}, {pipeline_mode = #tpu.pipeline_mode<synchronous>, transform_indices = @transform_1, window_bounds = array<i64: 16, 2>}, {pipeline_mode = #tpu.pipeline_mode<synchronous>, transform_indices = @transform_2, window_bounds = array<i64: 16, 16>}, {pipeline_mode = #tpu.pipeline_mode<synchronous>, transform_indices = @transform_3, window_bounds = array<i64: 16, 16>}, {pipeline_mode = #tpu.pipeline_mode<synchronous>, transform_indices = @transform_4, window_bounds = array<i64: 4, 16>}, {pipeline_mode = #tpu.pipeline_mode<synchronous>, transform_indices = @transform_5, window_bounds = array<i64: 52, 1>}, {transform_indices = @transform_6, window_bounds = array<i64: 4, 128>}]} {
    %c0 = arith.constant 0 : index
    %c0_0 = arith.constant 0 : index
    %0 = vector.load %arg6[%c0, %c0_0] : memref<52x1xf32, #tpu.memory_space<vmem>>, vector<16x1xf32>
    %c16 = arith.constant 16 : index
    %c0_1 = arith.constant 0 : index
    %1 = vector.load %arg6[%c16, %c0_1] : memref<52x1xf32, #tpu.memory_space<vmem>>, vector<16x1xf32>
    %c32 = arith.constant 32 : index
    %c0_2 = arith.constant 0 : index
    %2 = vector.load %arg6[%c32, %c0_2] : memref<52x1xf32, #tpu.memory_space<vmem>>, vector<16x1xf32>
    %c48 = arith.constant 48 : index
    %c0_3 = arith.constant 0 : index
    %3 = vector.load %arg6[%c48, %c0_3] : memref<52x1xf32, #tpu.memory_space<vmem>>, vector<4x1xf32>
    %c0_4 = arith.constant 0 : index
    %c0_5 = arith.constant 0 : index
    %4 = vector.load %arg1[%c0_4, %c0_5] : memref<2x128xf32, #tpu.memory_space<vmem>>, vector<2x128xf32>
    %c0_6 = arith.constant 0 : index
    %c0_7 = arith.constant 0 : index
    %5 = vector.load %arg2[%c0_6, %c0_7] : memref<16x2xf32, #tpu.memory_space<vmem>>, vector<16x2xf32>
    %6 = vector.extract_strided_slice %5 {offsets = [0, 0], sizes = [16, 1], strides = [1, 1]} : vector<16x2xf32> to vector<16x1xf32>
    %7 = vector.extract_strided_slice %4 {offsets = [0, 0], sizes = [1, 128], strides = [1, 1]} : vector<2x128xf32> to vector<1x128xf32>
    %8 = vector.broadcast %6 : vector<16x1xf32> to vector<16x128xf32>
    %9 = vector.broadcast %7 : vector<1x128xf32> to vector<16x128xf32>
    %10 = arith.mulf %8, %9 : vector<16x128xf32>
    %11 = vector.broadcast %0 : vector<16x1xf32> to vector<16x128xf32>
    %12 = arith.addf %11, %10 : vector<16x128xf32>
    %13 = vector.extract_strided_slice %5 {offsets = [0, 1], sizes = [16, 1], strides = [1, 1]} : vector<16x2xf32> to vector<16x1xf32>
    %14 = vector.extract_strided_slice %4 {offsets = [1, 0], sizes = [1, 128], strides = [1, 1]} : vector<2x128xf32> to vector<1x128xf32>
    %15 = vector.broadcast %13 : vector<16x1xf32> to vector<16x128xf32>
    %16 = vector.broadcast %14 : vector<1x128xf32> to vector<16x128xf32>
    %17 = arith.mulf %15, %16 : vector<16x128xf32>
    %18 = arith.addf %12, %17 : vector<16x128xf32>
    %cst = arith.constant 0.000000e+00 : f32
    %19 = vector.broadcast %cst : f32 to vector<16x128xf32>
    %20 = arith.maximumf %18, %19 : vector<16x128xf32>
    %c0_8 = arith.constant 0 : index
    %c0_9 = arith.constant 0 : index
    %21 = vector.load %arg3[%c0_8, %c0_9] : memref<16x16xf32, #tpu.memory_space<vmem>>, vector<16x16xf32>
    %cst_10 = arith.constant dense<0.000000e+00> : vector<16x128xf32>
    %22 = tpu.matmul %21, %20, %cst_10 {dimension_numbers = #tpu.dot_dimension_numbers<[1], [0], [0], [1], [0, 0, 1, 1], [], []>} : vector<16x16xf32>, vector<16x128xf32>, vector<16x128xf32> -> vector<16x128xf32>
    %23 = vector.broadcast %1 : vector<16x1xf32> to vector<16x128xf32>
    %24 = arith.addf %22, %23 : vector<16x128xf32>
    %cst_11 = arith.constant 0.000000e+00 : f32
    %25 = vector.broadcast %cst_11 : f32 to vector<16x128xf32>
    %26 = arith.maximumf %24, %25 : vector<16x128xf32>
    %c0_12 = arith.constant 0 : index
    %c0_13 = arith.constant 0 : index
    %27 = vector.load %arg4[%c0_12, %c0_13] : memref<16x16xf32, #tpu.memory_space<vmem>>, vector<16x16xf32>
    %cst_14 = arith.constant dense<0.000000e+00> : vector<16x128xf32>
    %28 = tpu.matmul %27, %26, %cst_14 {dimension_numbers = #tpu.dot_dimension_numbers<[1], [0], [0], [1], [0, 0, 1, 1], [], []>} : vector<16x16xf32>, vector<16x128xf32>, vector<16x128xf32> -> vector<16x128xf32>
    %29 = vector.broadcast %2 : vector<16x1xf32> to vector<16x128xf32>
    %30 = arith.addf %28, %29 : vector<16x128xf32>
    %cst_15 = arith.constant 0.000000e+00 : f32
    %31 = vector.broadcast %cst_15 : f32 to vector<16x128xf32>
    %32 = arith.maximumf %30, %31 : vector<16x128xf32>
    %c0_16 = arith.constant 0 : index
    %c0_17 = arith.constant 0 : index
    %33 = vector.load %arg5[%c0_16, %c0_17] : memref<4x16xf32, #tpu.memory_space<vmem>>, vector<4x16xf32>
    %cst_18 = arith.constant dense<0.000000e+00> : vector<4x128xf32>
    %34 = tpu.matmul %33, %32, %cst_18 {dimension_numbers = #tpu.dot_dimension_numbers<[1], [0], [0], [1], [0, 0, 1, 1], [], []>} : vector<4x16xf32>, vector<16x128xf32>, vector<4x128xf32> -> vector<4x128xf32>
    %35 = vector.broadcast %3 : vector<4x1xf32> to vector<4x128xf32>
    %36 = arith.addf %34, %35 : vector<4x128xf32>
    %c0_19 = arith.constant 0 : index
    %c0_20 = arith.constant 0 : index
    %37 = vector.load %arg7[%c0_19, %c0_20] : memref<4x128xf32, #tpu.memory_space<vmem>>, vector<4x128xf32>
    tpu.vector_store %arg7[%c0_19, %c0_20], %36 {strides = array<i32>} : memref<4x128xf32, #tpu.memory_space<vmem>>, vector<4x128xf32>,
    return
  }
  func.func @transform_0(%arg0: i32) -> (i32, i32) {
    %c0_i32 = arith.constant 0 : i32
    %c0_i32_0 = arith.constant 0 : i32
    return %c0_i32, %arg0 : i32, i32
  }
  func.func @transform_1(%arg0: i32) -> (i32, i32) {
    %c0_i32 = arith.constant 0 : i32
    %c0_i32_0 = arith.constant 0 : i32
    %c0_i32_1 = arith.constant 0 : i32
    return %c0_i32, %c0_i32_0 : i32, i32
  }
  func.func @transform_2(%arg0: i32) -> (i32, i32) {
    %c0_i32 = arith.constant 0 : i32
    %c0_i32_0 = arith.constant 0 : i32
    %c0_i32_1 = arith.constant 0 : i32
    return %c0_i32, %c0_i32_0 : i32, i32
  }
  func.func @transform_3(%arg0: i32) -> (i32, i32) {
    %c0_i32 = arith.constant 0 : i32
    %c0_i32_0 = arith.constant 0 : i32
    %c0_i32_1 = arith.constant 0 : i32
    return %c0_i32, %c0_i32_0 : i32, i32
  }
  func.func @transform_4(%arg0: i32) -> (i32, i32) {
    %c0_i32 = arith.constant 0 : i32
    %c0_i32_0 = arith.constant 0 : i32
    %c0_i32_1 = arith.constant 0 : i32
    return %c0_i32, %c0_i32_0 : i32, i32
  }
  func.func @transform_5(%arg0: i32) -> (i32, i32) {
    %c0_i32 = arith.constant 0 : i32
    %c0_i32_0 = arith.constant 0 : i32
    %c0_i32_1 = arith.constant 0 : i32
    return %c0_i32, %c0_i32_0 : i32, i32
  }
  func.func @transform_6(%arg0: i32) -> (i32, i32) {
    %c0_i32 = arith.constant 0 : i32
    %c0_i32_0 = arith.constant 0 : i32
    return %c0_i32, %arg0 : i32, i32
  }
}

</mosaic_0001>

<llo_original>
// kernel: embedding_model_forward.1
$region0: #{embedding_model_forward.1}
  #allocation0 [shape = 'u32[]', space=smem, size = 0x4, offset = 0x4, fixed_abs, tag = 'smem constant byte address 0x4 - core index']
  #allocation1 [shape = 'u32[144,128]{1,0:T(1,128)}', space=vmem, size = 0x12000, scoped, tag = 'internal scratch']
  %s0 = inlined_call_operand.vmem [shape: f32[2,128], index: 0, kind: input, shape index: {}]
  %s1 = inlined_call_operand.vmem [shape: f32[16,2], index: 1, kind: input, shape index: {}]
  %s2 = inlined_call_operand.vmem [shape: f32[16,16], index: 2, kind: input, shape index: {}]
  %s3 = inlined_call_operand.vmem [shape: f32[16,16], index: 3, kind: input, shape index: {}]
  %s4 = inlined_call_operand.vmem [shape: f32[4,16], index: 4, kind: input, shape index: {}]
  %s5 = inlined_call_operand.vmem [shape: f32[52,1], index: 5, kind: input, shape index: {}]
  %s6 = inlined_call_operand.vmem [shape: f32[4,128], index: 6, kind: output, shape index: {}]
  %s7 = sld [smem:[#allocation0]]
  $region34: #{embedding_model_forward.1} parent=0
    _
  %s9 = ssub.s32 1, %s7
  %s10 = scalar_select 0, %s9, %s7
  // Predicated region
  $region2: #{embedding_model_forward.1} parent=0 // pred_check
    _
  $region3: #{embedding_model_forward.1} parent=0 // pred_check_branch
    %12 = sbr.rel (0) target = $region5
  $region4: #{embedding_model_forward.1} parent=0 // pred_region
    _
  $region5: #{embedding_model_forward.1} parent=0 // pred_fallthru
    _
  // Predicated region
  $region6: #{embedding_model_forward.1} parent=0 // pred_check
    _
  $region7: #{embedding_model_forward.1} parent=0 // pred_check_branch
    %14 = sbr.rel (0) target = $region9
  $region8: #{embedding_model_forward.1} parent=0 // pred_region
    _
  $region9: #{embedding_model_forward.1} parent=0 // pred_fallthru
    _
  // Predicated region
  $region10: #{embedding_model_forward.1} parent=0 // pred_check
    _
  $region11: #{embedding_model_forward.1} parent=0 // pred_check_branch
    %16 = sbr.rel (0) target = $region13
  $region12: #{embedding_model_forward.1} parent=0 // pred_region
    _
  $region13: #{embedding_model_forward.1} parent=0 // pred_fallthru
    _
  // Predicated region
  $region14: #{embedding_model_forward.1} parent=0 // pred_check
    _
  $region15: #{embedding_model_forward.1} parent=0 // pred_check_branch
    %18 = sbr.rel (0) target = $region17
  $region16: #{embedding_model_forward.1} parent=0 // pred_region
    _
  $region17: #{embedding_model_forward.1} parent=0 // pred_fallthru
    _
  // Predicated region
  $region18: #{embedding_model_forward.1} parent=0 // pred_check
    _
  $region19: #{embedding_model_forward.1} parent=0 // pred_check_branch
    %20 = sbr.rel (0) target = $region21
  $region20: #{embedding_model_forward.1} parent=0 // pred_region
    _
  $region21: #{embedding_model_forward.1} parent=0 // pred_fallthru
    _
  // Predicated region
  $region22: #{embedding_model_forward.1} parent=0 // pred_check
    _
  $region23: #{embedding_model_forward.1} parent=0 // pred_check_branch
    %22 = sbr.rel (0) target = $region25
  $region24: #{embedding_model_forward.1} parent=0 // pred_region
    _
  $region25: #{embedding_model_forward.1} parent=0 // pred_fallthru
    _
  %v23 = vld [vmem:[%s5] sm:$0xff]
  %v24 = vld [vmem:[%s5 + $0x8] sm:$0xff]
  %v25 = vld [vmem:[%s5 + $0x10] sm:$0xff]
  %v26 = vld [vmem:[%s5 + $0x18] sm:$0xff]
  %v27 = vld [vmem:[%s5 + $0x20] sm:$0xff]
  %v28 = vld [vmem:[%s5 + $0x28] sm:$0xff]
  %v29 = vld [vmem:[%s5 + $0x30] sm:$0xf]
  %v30 = vld [vmem:[%s0] sm:$0x3]
  %v31 = vld [vmem:[%s1] sm:$0xff]
  %v32 = vld [vmem:[%s1 + $0x8] sm:$0xff]
  %34 = vset.pattern.permute.xlu0 0
  %35 = vperm.xlu0 %34, %v31
  %v36 = vpop.permute.xlu0 %35
  %39 = vset.pattern.permute.xlu0 0
  %40 = vperm.xlu0 %39, %v32
  %v41 = vpop.permute.xlu0 %40
  %v43 = vlaneseq
  %v44 = vshrl.u32 %v43, 7
  %v45 = vsub.s32 0, %v44
  %v46 = vrot.slane %v30, %v45
  %v47 = vmul.f32 %v36, %v46
  %v48 = vmul.f32 %v41, %v46
  %50 = vset.pattern.permute.xlu0 0
  %51 = vperm.xlu0 %50, %v23
  %v52 = vpop.permute.xlu0 %51
  %55 = vset.pattern.permute.xlu0 0
  %56 = vperm.xlu0 %55, %v24
  %v57 = vpop.permute.xlu0 %56
  %v59 = vadd.f32 %v52, %v47
  %v60 = vadd.f32 %v57, %v48
  %61 = vset.pattern.permute.xlu0 1
  %62 = vperm.xlu0 %61, %v31
  %v63 = vpop.permute.xlu0 %62
  %65 = vset.pattern.permute.xlu0 1
  %66 = vperm.xlu0 %65, %v32
  %v67 = vpop.permute.xlu0 %66
  %v69 = vlaneseq
  %v70 = vshrl.u32 %v69, 7
  %v71 = vsub.s32 1, %v70
  %v72 = vrot.slane %v30, %v71
  %v73 = vmul.f32 %v63, %v72
  %v74 = vmul.f32 %v67, %v72
  %v75 = vadd.f32 %v59, %v73
  %v76 = vadd.f32 %v60, %v74
  %v77 = vmax.f32 %v75, 0.0
  %v78 = vmax.f32 %v76, 0.0
  %v79 = vld [vmem:[%s2] sm:$0xff]
  %v80 = vld [vmem:[%s2 + $0x8] sm:$0xff]
  %82 = vset.pattern.permute.xlu0 0
  %83 = vperm.xlu0 %82, %v25
  %v84 = vpop.permute.xlu0 %83
  %87 = vset.pattern.permute.xlu0 0
  %88 = vperm.xlu0 %87, %v26
  %v89 = vpop.permute.xlu0 %88
  %vm91 = vcmask 130048
  %v93 = vsel %vm91, %v79, 0
  %v96 = vsel %vm91, %v80, 0
  %98 = vmatprep.subr.mxu0 0.0
  %99 = vmatpush1.msra.mxu0 0.0
  %100 = vmatprep.subr.mxu0 0.0
  %101 = vmatpush1.msra.mxu0 0.0
  %102 = vmatprep.subr.mxu0 0.0
  %103 = vmatpush1.msra.mxu0 0.0
  %104 = vmatprep.subr.mxu0 0.0
  %105 = vmatpush1.msra.mxu0 0.0
  %106 = vmatprep.subr.mxu0 0.0
  %107 = vmatpush1.msra.mxu0 0.0
  %108 = vmatprep.subr.mxu0 0.0
  %109 = vmatpush1.msra.mxu0 0.0
  %110 = vmatprep.subr.mxu0 0.0
  %111 = vmatpush1.msra.mxu0 0.0
  %112 = vmatprep.subr.mxu0 0.0
  %113 = vmatpush1.msra.mxu0 0.0
  %114 = vmatprep.subr.mxu0 0.0
  %115 = vmatpush1.msra.mxu0 0.0
  %116 = vmatprep.subr.mxu0 0.0
  %117 = vmatpush1.msra.mxu0 0.0
  %118 = vmatprep.subr.mxu0 0.0
  %119 = vmatpush1.msra.mxu0 0.0
  %120 = vmatprep.subr.mxu0 0.0
  %121 = vmatpush1.msra.mxu0 0.0
  %122 = vmatprep.subr.mxu0 0.0
  %123 = vmatpush1.msra.mxu0 0.0
  %124 = vmatprep.subr.mxu0 0.0
  %125 = vmatpush1.msra.mxu0 0.0
  %126 = vmatprep.subr.mxu0 0.0
  %127 = vmatpush1.msra.mxu0 %v78
  %128 = vmatprep.subr.mxu0 0.0
  %129 = vmatpush1.msra.mxu0 %v77
  %130 = vmatprep.subr.mxu0 0.0
  %131 = vmatpush2.msra.mxu0 0.0
  %132 = vmatprep.subr.mxu0 0.0
  %133 = vmatpush2.msra.mxu0 0.0
  %134 = vmatprep.subr.mxu0 0.0
  %135 = vmatpush2.msra.mxu0 0.0
  %136 = vmatprep.subr.mxu0 0.0
  %137 = vmatpush2.msra.mxu0 0.0
  %138 = vmatprep.subr.mxu0 0.0
  %139 = vmatpush2.msra.mxu0 0.0
  %140 = vmatprep.subr.mxu0 0.0
  %141 = vmatpush2.msra.mxu0 0.0
  %142 = vmatprep.subr.mxu0 0.0
  %143 = vmatpush2.msra.mxu0 0.0
  %144 = vmatprep.subr.mxu0 0.0
  %145 = vmatpush2.msra.mxu0 0.0
  %146 = vmatprep.subr.mxu0 0.0
  %147 = vmatpush2.msra.mxu0 0.0
  %148 = vmatprep.subr.mxu0 0.0
  %149 = vmatpush2.msra.mxu0 0.0
  %150 = vmatprep.subr.mxu0 0.0
  %151 = vmatpush2.msra.mxu0 0.0
  %152 = vmatprep.subr.mxu0 0.0
  %153 = vmatpush2.msra.mxu0 0.0
  %154 = vmatprep.subr.mxu0 0.0
  %155 = vmatpush2.msra.mxu0 0.0
  %156 = vmatprep.subr.mxu0 0.0
  %157 = vmatpush2.msra.mxu0 0.0
  %158 = vmatprep.subr.mxu0 0.0
  %159 = vmatpush2.msra.mxu0 0.0
  %160 = vmatprep.subr.mxu0 0.0
  %161 = vmatpush2.msra.mxu0 0.0
  %162 = vmatprep.mubr.f32.mxu0 0.0
  %163 = vmatmul.mubr.f32.gmra.mxu0 %v93
  %v164 = vpop.f32.mrf.mxu0
  %v165 = vadd.f32 %v84, %v164
  %v166 = vpop.f32.mrf.mxu0
  %167 = vmatprep.mubr.f32.mxu0 0.0
  %168 = vmatmul.mubr.f32.gmra.mxu0 %v96
  %v169 = vpop.f32.mrf.mxu0
  %v170 = vadd.f32 %v89, %v169
  %v171 = vpop.f32.mrf.mxu0
  %172 = vdwg.mxu0
  %v173 = vmax.f32 %v165, 0.0
  %v174 = vmax.f32 %v170, 0.0
  %v175 = vld [vmem:[%s3] sm:$0xff]
  %v176 = vld [vmem:[%s3 + $0x8] sm:$0xff]
  %178 = vset.pattern.permute.xlu0 0
  %179 = vperm.xlu0 %178, %v27
  %v180 = vpop.permute.xlu0 %179
  %183 = vset.pattern.permute.xlu0 0
  %184 = vperm.xlu0 %183, %v28
  %v185 = vpop.permute.xlu0 %184
  %v188 = vsel %vm91, %v175, 0
  %v191 = vsel %vm91, %v176, 0
  %193 = vmatprep.subr.mxu0 0.0
  %194 = vmatpush1.msra.mxu0 0.0
  %195 = vmatprep.subr.mxu0 0.0
  %196 = vmatpush1.msra.mxu0 0.0
  %197 = vmatprep.subr.mxu0 0.0
  %198 = vmatpush1.msra.mxu0 0.0
  %199 = vmatprep.subr.mxu0 0.0
  %200 = vmatpush1.msra.mxu0 0.0
  %201 = vmatprep.subr.mxu0 0.0
  %202 = vmatpush1.msra.mxu0 0.0
  %203 = vmatprep.subr.mxu0 0.0
  %204 = vmatpush1.msra.mxu0 0.0
  %205 = vmatprep.subr.mxu0 0.0
  %206 = vmatpush1.msra.mxu0 0.0
  %207 = vmatprep.subr.mxu0 0.0
  %208 = vmatpush1.msra.mxu0 0.0
  %209 = vmatprep.subr.mxu0 0.0
  %210 = vmatpush1.msra.mxu0 0.0
  %211 = vmatprep.subr.mxu0 0.0
  %212 = vmatpush1.msra.mxu0 0.0
  %213 = vmatprep.subr.mxu0 0.0
  %214 = vmatpush1.msra.mxu0 0.0
  %215 = vmatprep.subr.mxu0 0.0
  %216 = vmatpush1.msra.mxu0 0.0
  %217 = vmatprep.subr.mxu0 0.0
  %218 = vmatpush1.msra.mxu0 0.0
  %219 = vmatprep.subr.mxu0 0.0
  %220 = vmatpush1.msra.mxu0 0.0
  %221 = vmatprep.subr.mxu0 0.0
  %222 = vmatpush1.msra.mxu0 %v174
  %223 = vmatprep.subr.mxu0 0.0
  %224 = vmatpush1.msra.mxu0 %v173
  %225 = vmatprep.subr.mxu0 0.0
  %226 = vmatpush2.msra.mxu0 0.0
  %227 = vmatprep.subr.mxu0 0.0
  %228 = vmatpush2.msra.mxu0 0.0
  %229 = vmatprep.subr.mxu0 0.0
  %230 = vmatpush2.msra.mxu0 0.0
  %231 = vmatprep.subr.mxu0 0.0
  %232 = vmatpush2.msra.mxu0 0.0
  %233 = vmatprep.subr.mxu0 0.0
  %234 = vmatpush2.msra.mxu0 0.0
  %235 = vmatprep.subr.mxu0 0.0
  %236 = vmatpush2.msra.mxu0 0.0
  %237 = vmatprep.subr.mxu0 0.0
  %238 = vmatpush2.msra.mxu0 0.0
  %239 = vmatprep.subr.mxu0 0.0
  %240 = vmatpush2.msra.mxu0 0.0
  %241 = vmatprep.subr.mxu0 0.0
  %242 = vmatpush2.msra.mxu0 0.0
  %243 = vmatprep.subr.mxu0 0.0
  %244 = vmatpush2.msra.mxu0 0.0
  %245 = vmatprep.subr.mxu0 0.0
  %246 = vmatpush2.msra.mxu0 0.0
  %247 = vmatprep.subr.mxu0 0.0
  %248 = vmatpush2.msra.mxu0 0.0
  %249 = vmatprep.subr.mxu0 0.0
  %250 = vmatpush2.msra.mxu0 0.0
  %251 = vmatprep.subr.mxu0 0.0
  %252 = vmatpush2.msra.mxu0 0.0
  %253 = vmatprep.subr.mxu0 0.0
  %254 = vmatpush2.msra.mxu0 0.0
  %255 = vmatprep.subr.mxu0 0.0
  %256 = vmatpush2.msra.mxu0 0.0
  %257 = vmatprep.mubr.f32.mxu0 0.0
  %258 = vmatmul.mubr.f32.gmra.mxu0 %v188
  %v259 = vpop.f32.mrf.mxu0
  %v260 = vadd.f32 %v180, %v259
  %v261 = vpop.f32.mrf.mxu0
  %262 = vmatprep.mubr.f32.mxu0 0.0
  %263 = vmatmul.mubr.f32.gmra.mxu0 %v191
  %v264 = vpop.f32.mrf.mxu0
  %v265 = vadd.f32 %v185, %v264
  %v266 = vpop.f32.mrf.mxu0
  %267 = vdwg.mxu0
  %v268 = vmax.f32 %v260, 0.0
  %v269 = vmax.f32 %v265, 0.0
  %v270 = vld [vmem:[%s4] sm:$0xf]
  %272 = vset.pattern.permute.xlu0 0
  %273 = vperm.xlu0 %272, %v29
  %v274 = vpop.permute.xlu0 %273
  %v277 = vsel %vm91, %v270, 0
  %279 = vmatprep.subr.mxu0 0.0
  %280 = vmatpush1.msra.mxu0 0.0
  %281 = vmatprep.subr.mxu0 0.0
  %282 = vmatpush1.msra.mxu0 0.0
  %283 = vmatprep.subr.mxu0 0.0
  %284 = vmatpush1.msra.mxu0 0.0
  %285 = vmatprep.subr.mxu0 0.0
  %286 = vmatpush1.msra.mxu0 0.0
  %287 = vmatprep.subr.mxu0 0.0
  %288 = vmatpush1.msra.mxu0 0.0
  %289 = vmatprep.subr.mxu0 0.0
  %290 = vmatpush1.msra.mxu0 0.0
  %291 = vmatprep.subr.mxu0 0.0
  %292 = vmatpush1.msra.mxu0 0.0
  %293 = vmatprep.subr.mxu0 0.0
  %294 = vmatpush1.msra.mxu0 0.0
  %295 = vmatprep.subr.mxu0 0.0
  %296 = vmatpush1.msra.mxu0 0.0
  %297 = vmatprep.subr.mxu0 0.0
  %298 = vmatpush1.msra.mxu0 0.0
  %299 = vmatprep.subr.mxu0 0.0
  %300 = vmatpush1.msra.mxu0 0.0
  %301 = vmatprep.subr.mxu0 0.0
  %302 = vmatpush1.msra.mxu0 0.0
  %303 = vmatprep.subr.mxu0 0.0
  %304 = vmatpush1.msra.mxu0 0.0
  %305 = vmatprep.subr.mxu0 0.0
  %306 = vmatpush1.msra.mxu0 0.0
  %307 = vmatprep.subr.mxu0 0.0
  %308 = vmatpush1.msra.mxu0 %v269
  %309 = vmatprep.subr.mxu0 0.0
  %310 = vmatpush1.msra.mxu0 %v268
  %311 = vmatprep.subr.mxu0 0.0
  %312 = vmatpush2.msra.mxu0 0.0
  %313 = vmatprep.subr.mxu0 0.0
  %314 = vmatpush2.msra.mxu0 0.0
  %315 = vmatprep.subr.mxu0 0.0
  %316 = vmatpush2.msra.mxu0 0.0
  %317 = vmatprep.subr.mxu0 0.0
  %318 = vmatpush2.msra.mxu0 0.0
  %319 = vmatprep.subr.mxu0 0.0
  %320 = vmatpush2.msra.mxu0 0.0
  %321 = vmatprep.subr.mxu0 0.0
  %322 = vmatpush2.msra.mxu0 0.0
  %323 = vmatprep.subr.mxu0 0.0
  %324 = vmatpush2.msra.mxu0 0.0
  %325 = vmatprep.subr.mxu0 0.0
  %326 = vmatpush2.msra.mxu0 0.0
  %327 = vmatprep.subr.mxu0 0.0
  %328 = vmatpush2.msra.mxu0 0.0
  %329 = vmatprep.subr.mxu0 0.0
  %330 = vmatpush2.msra.mxu0 0.0
  %331 = vmatprep.subr.mxu0 0.0
  %332 = vmatpush2.msra.mxu0 0.0
  %333 = vmatprep.subr.mxu0 0.0
  %334 = vmatpush2.msra.mxu0 0.0
  %335 = vmatprep.subr.mxu0 0.0
  %336 = vmatpush2.msra.mxu0 0.0
  %337 = vmatprep.subr.mxu0 0.0
  %338 = vmatpush2.msra.mxu0 0.0
  %339 = vmatprep.subr.mxu0 0.0
  %340 = vmatpush2.msra.mxu0 0.0
  %341 = vmatprep.subr.mxu0 0.0
  %342 = vmatpush2.msra.mxu0 0.0
  %343 = vmatprep.mubr.f32.mxu0 0.0
  %344 = vmatmul.mubr.f32.gmra.mxu0 %v277
  %v345 = vpop.f32.mrf.mxu0
  %v346 = vadd.f32 %v274, %v345
  %v347 = vpop.f32.mrf.mxu0
  %348 = vdwg.mxu0
  %349 = vst [vmem:[%s6] sm:$0xf] %v346
  // Predicated region
  $region26: #{embedding_model_forward.1} parent=0 // pred_check
    _
  $region27: #{embedding_model_forward.1} parent=0 // pred_check_branch
    %351 = sbr.rel (0) target = $region29
  $region28: #{embedding_model_forward.1} parent=0 // pred_region
    _
  $region29: #{embedding_model_forward.1} parent=0 // pred_fallthru
    _
  // Predicated region
  $region30: #{embedding_model_forward.1} parent=0 // pred_check
    _
  $region31: #{embedding_model_forward.1} parent=0 // pred_check_branch
    %353 = sbr.rel (0) target = $region33
  $region32: #{embedding_model_forward.1} parent=0 // pred_region
    _
  $region33: #{embedding_model_forward.1} parent=0 // pred_fallthru
    _

</llo_original>
